<compile_context>
chip_gen: v6e
topology: v6e:2x2x1
jax: 0.10.0
libtpu: 0.0.40
codegen_flags: <defaults>
</compile_context>

<pallas_src>
import jax
import jax.numpy as jnp
from jax.experimental import pallas as pl
from jax.experimental.pallas import tpu as pltpu

INPUT_DIM = 391
HIDDEN_DIM = 32
MAX_BATCH_TILE = 2048   # rows per grid step; VMEM-safe on v5e / v6e / v7x


def _round_up(x, m):
    return (x + m - 1) // m * m


def mlp_kernel(x_ref, w1_ref, b1_ref, w2_ref, b2_ref, w3_ref, b3_ref, o_ref):
    x = x_ref[...]                                                  # (TB, 391) bf16
    # layer 1: Linear(391, 32) + ReLU   (Dropouts are identity in eval mode)
    h1 = jnp.dot(x, w1_ref[...], preferred_element_type=jnp.float32) + b1_ref[...]
    h1 = jnp.maximum(h1, 0.0).astype(jnp.bfloat16)
    # layer 2: Linear(32, 32) + ReLU
    h2 = jnp.dot(h1, w2_ref[...], preferred_element_type=jnp.float32) + b2_ref[...]
    h2 = jnp.maximum(h2, 0.0).astype(jnp.bfloat16)
    # head: Linear(32, 1)
    out = jnp.dot(h2, w3_ref[...], preferred_element_type=jnp.float32) + b3_ref[...]
    o_ref[...] = out.astype(o_ref.dtype)


def bcl_mlp_forward(x, params):
    """x: (N, 391) float array.  params: dict of pre-transposed weights/biases."""
    # bf16 operands for halved HBM traffic + fast MXU path; f32 accumulation.
    x = x.astype(jnp.bfloat16)
    w1 = params["w1"].astype(jnp.bfloat16)
    w2 = params["w2"].astype(jnp.bfloat16)
    w3 = params["w3"].astype(jnp.bfloat16)
    b1 = params["b1"].astype(jnp.float32)
    b2 = params["b2"].astype(jnp.float32)
    b3 = params["b3"].astype(jnp.float32)

    n = x.shape[0]
    # Tile choice: as large as possible (up to MAX_BATCH_TILE) while keeping
    # at least 2 grid steps when the batch allows (megacore sharding), and a
    # multiple of 8 for the sublane constraint.
    bt = max(8, min(MAX_BATCH_TILE, _round_up(pl.cdiv(n, 2), 8)))
    n_pad = _round_up(n, bt)
    if n_pad != n:
        x = jnp.pad(x, ((0, n_pad - n), (0, 0)))
    grid = (n_pad // bt,)

    # Constant-index full blocks for the (tiny) weights/biases; the pipeliner
    # skips re-fetching blocks whose index does not change across grid steps.
    full = lambda shape: pl.BlockSpec(shape, lambda i: (0, 0))

    per_row_flops = 2 * (INPUT_DIM * HIDDEN_DIM + HIDDEN_DIM * HIDDEN_DIM + HIDDEN_DIM)
    cost = pl.CostEstimate(
        flops=n_pad * per_row_flops,
        transcendentals=0,
        bytes_accessed=(n_pad * INPUT_DIM * 2            # x (bf16)
                        + n_pad * 4                      # output (f32)
                        + (INPUT_DIM * HIDDEN_DIM + HIDDEN_DIM * HIDDEN_DIM
                           + HIDDEN_DIM) * 2             # weights (bf16)
                        + (2 * HIDDEN_DIM + 1) * 4),     # biases (f32)
    )

    out = pl.pallas_call(
        mlp_kernel,
        out_shape=jax.ShapeDtypeStruct((n_pad, 1), jnp.float32),
        grid_spec=pltpu.PrefetchScalarGridSpec(
            num_scalar_prefetch=0,
            grid=grid,
            in_specs=[
                pl.BlockSpec((bt, INPUT_DIM), lambda i: (i, 0)),   # x tile
                full((INPUT_DIM, HIDDEN_DIM)),                     # w1
                full((1, HIDDEN_DIM)),                             # b1
                full((HIDDEN_DIM, HIDDEN_DIM)),                    # w2
                full((1, HIDDEN_DIM)),                             # b2
                full((HIDDEN_DIM, 1)),                             # w3
                full((1, 1)),                                      # b3
            ],
            out_specs=pl.BlockSpec((bt, 1), lambda i: (i, 0)),
        ),
        compiler_params=pltpu.CompilerParams(
            dimension_semantics=("parallel",),
            vmem_limit_bytes=32 << 20,
        ),
        cost_estimate=cost,
    )(x, w1, b1, w2, b2, w3, b3)

    return out[:n]


def init_params(key):
    """Deterministic init mimicking torch.nn.Linear (U[-1/sqrt(fan_in), +])."""
    ks = jax.random.split(key, 6)

    def linear(kw, kb, fan_in, fan_out):
        bound = 1.0 / jnp.sqrt(fan_in)
        # stored pre-transposed: (fan_in, fan_out)
        w = jax.random.uniform(kw, (fan_in, fan_out), jnp.float32, -bound, bound)
        b = jax.random.uniform(kb, (1, fan_out), jnp.float32, -bound, bound)
        return w, b

    w1, b1 = linear(ks[0], ks[1], INPUT_DIM, HIDDEN_DIM)
    w2, b2 = linear(ks[2], ks[3], HIDDEN_DIM, HIDDEN_DIM)
    w3, b3 = linear(ks[4], ks[5], HIDDEN_DIM, 1)
    return {"w1": w1, "b1": b1, "w2": w2, "b2": b2, "w3": w3, "b3": b3}


def reference_forward(x, p):
    """Pure-JAX reference mirroring the kernel's bf16-operand / f32-accum math."""
    xb = x.astype(jnp.bfloat16)
    w1 = p["w1"].astype(jnp.bfloat16)
    w2 = p["w2"].astype(jnp.bfloat16)
    w3 = p["w3"].astype(jnp.bfloat16)
    h1 = jnp.dot(xb, w1, preferred_element_type=jnp.float32) + p["b1"]
    h1 = jnp.maximum(h1, 0.0).astype(jnp.bfloat16)
    h2 = jnp.dot(h1, w2, preferred_element_type=jnp.float32) + p["b2"]
    h2 = jnp.maximum(h2, 0.0).astype(jnp.bfloat16)
    return jnp.dot(h2, w3, preferred_element_type=jnp.float32) + p["b3"]


if __name__ == "__main__":
    key = jax.random.PRNGKey(0)
    kx, kp = jax.random.split(key)

    # batch_data.bcl: e.g. (2, 8, 391) -> view(-1, 391) = (16, 391)
    bcl = jax.random.normal(kx, (2, 8, INPUT_DIM), dtype=jnp.float32)
    x = bcl.reshape(-1, INPUT_DIM)

    params = init_params(kp)

    out = bcl_mlp_forward(x, params)
    out = jax.block_until_ready(out)

    ref = reference_forward(x, params)
    assert out.shape == (x.shape[0], 1)
    assert jnp.allclose(out, ref, atol=2e-2, rtol=2e-2)

    print("KERNEL_OK")
</pallas_src>

<mosaic_0001>
module attributes {stable_mosaic.version = 11 : i64} {
  func.func @mlp_kernel(%arg0: i32, %arg1: memref<8x391xbf16, #tpu.memory_space<vmem>>, %arg2: memref<391x32xbf16, #tpu.memory_space<vmem>>, %arg3: memref<1x32xf32, #tpu.memory_space<vmem>>, %arg4: memref<32x32xbf16, #tpu.memory_space<vmem>>, %arg5: memref<1x32xf32, #tpu.memory_space<vmem>>, %arg6: memref<32x1xbf16, #tpu.memory_space<vmem>>, %arg7: memref<1x1xf32, #tpu.memory_space<vmem>>, %arg8: memref<8x1xf32, #tpu.memory_space<vmem>>) attributes {dimension_semantics = [#tpu.dimension_semantics<parallel>], iteration_bounds = array<i64: 2>, scalar_prefetch = 0 : i64, scratch_operands = 0 : i64, tpu.core_type = #tpu.core_type<tc>, window_params = [{transform_indices = @transform_0, window_bounds = array<i64: 8, 391>}, {pipeline_mode = #tpu.pipeline_mode<synchronous>, transform_indices = @transform_1, window_bounds = array<i64: 391, 32>}, {pipeline_mode = #tpu.pipeline_mode<synchronous>, transform_indices = @transform_2, window_bounds = array<i64: 1, 32>}, {pipeline_mode = #tpu.pipeline_mode<synchronous>, transform_indices = @transform_3, window_bounds = array<i64: 32, 32>}, {pipeline_mode = #tpu.pipeline_mode<synchronous>, transform_indices = @transform_4, window_bounds = array<i64: 1, 32>}, {pipeline_mode = #tpu.pipeline_mode<synchronous>, transform_indices = @transform_5, window_bounds = array<i64: 32, 1>}, {pipeline_mode = #tpu.pipeline_mode<synchronous>, transform_indices = @transform_6, window_bounds = array<i64: 1, 1>}, {transform_indices = @transform_7, window_bounds = array<i64: 8, 1>}]} {
    %c0 = arith.constant 0 : index
    %c0_0 = arith.constant 0 : index
    %0 = vector.load %arg1[%c0, %c0_0] : memref<8x391xbf16, #tpu.memory_space<vmem>>, vector<8x391xbf16>
    %c0_1 = arith.constant 0 : index
    %c0_2 = arith.constant 0 : index
    %1 = vector.load %arg2[%c0_1, %c0_2] : memref<391x32xbf16, #tpu.memory_space<vmem>>, vector<391x32xbf16>
    %cst = arith.constant dense<0.000000e+00> : vector<8x32xf32>
    %2 = tpu.matmul %0, %1, %cst {dimension_numbers = #tpu.dot_dimension_numbers<[1], [0], [0], [1], [0, 0, 1, 1], [], []>} : vector<8x391xbf16>, vector<391x32xbf16>, vector<8x32xf32> -> vector<8x32xf32>
    %c0_3 = arith.constant 0 : index
    %c0_4 = arith.constant 0 : index
    %3 = vector.load %arg3[%c0_3, %c0_4] : memref<1x32xf32, #tpu.memory_space<vmem>>, vector<1x32xf32>
    %4 = vector.broadcast %3 : vector<1x32xf32> to vector<8x32xf32>
    %5 = arith.addf %2, %4 : vector<8x32xf32>
    %cst_5 = arith.constant 0.000000e+00 : f32
    %6 = vector.broadcast %cst_5 : f32 to vector<8x32xf32>
    %7 = arith.maximumf %5, %6 : vector<8x32xf32>
    %8 = arith.truncf %7 : vector<8x32xf32> to vector<8x32xbf16>
    %c0_6 = arith.constant 0 : index
    %c0_7 = arith.constant 0 : index
    %9 = vector.load %arg4[%c0_6, %c0_7] : memref<32x32xbf16, #tpu.memory_space<vmem>>, vector<32x32xbf16>
    %cst_8 = arith.constant dense<0.000000e+00> : vector<8x32xf32>
    %10 = tpu.matmul %8, %9, %cst_8 {dimension_numbers = #tpu.dot_dimension_numbers<[1], [0], [0], [1], [0, 0, 1, 1], [], []>} : vector<8x32xbf16>, vector<32x32xbf16>, vector<8x32xf32> -> vector<8x32xf32>
    %c0_9 = arith.constant 0 : index
    %c0_10 = arith.constant 0 : index
    %11 = vector.load %arg5[%c0_9, %c0_10] : memref<1x32xf32, #tpu.memory_space<vmem>>, vector<1x32xf32>
    %12 = vector.broadcast %11 : vector<1x32xf32> to vector<8x32xf32>
    %13 = arith.addf %10, %12 : vector<8x32xf32>
    %cst_11 = arith.constant 0.000000e+00 : f32
    %14 = vector.broadcast %cst_11 : f32 to vector<8x32xf32>
    %15 = arith.maximumf %13, %14 : vector<8x32xf32>
    %16 = arith.truncf %15 : vector<8x32xf32> to vector<8x32xbf16>
    %c0_12 = arith.constant 0 : index
    %c0_13 = arith.constant 0 : index
    %17 = vector.load %arg6[%c0_12, %c0_13] : memref<32x1xbf16, #tpu.memory_space<vmem>>, vector<32x1xbf16>
    %cst_14 = arith.constant dense<0.000000e+00> : vector<8x1xf32>
    %18 = tpu.matmul %16, %17, %cst_14 {dimension_numbers = #tpu.dot_dimension_numbers<[1], [0], [0], [1], [0, 0, 1, 1], [], []>} : vector<8x32xbf16>, vector<32x1xbf16>, vector<8x1xf32> -> vector<8x1xf32>
    %c0_15 = arith.constant 0 : index
    %c0_16 = arith.constant 0 : index
    %19 = vector.load %arg7[%c0_15, %c0_16] : memref<1x1xf32, #tpu.memory_space<vmem>>, vector<1x1xf32>
    %20 = vector.broadcast %19 : vector<1x1xf32> to vector<8x1xf32>
    %21 = arith.addf %18, %20 : vector<8x1xf32>
    %c0_17 = arith.constant 0 : index
    %c0_18 = arith.constant 0 : index
    %22 = vector.load %arg8[%c0_17, %c0_18] : memref<8x1xf32, #tpu.memory_space<vmem>>, vector<8x1xf32>
    tpu.vector_store %arg8[%c0_17, %c0_18], %21 {strides = array<i32>} : memref<8x1xf32, #tpu.memory_space<vmem>>, vector<8x1xf32>,
    return
  }
  func.func @transform_0(%arg0: i32) -> (i32, i32) {
    %c0_i32 = arith.constant 0 : i32
    %c0_i32_0 = arith.constant 0 : i32
    return %arg0, %c0_i32 : i32, i32
  }
  func.func @transform_1(%arg0: i32) -> (i32, i32) {
    %c0_i32 = arith.constant 0 : i32
    %c0_i32_0 = arith.constant 0 : i32
    %c0_i32_1 = arith.constant 0 : i32
    return %c0_i32, %c0_i32_0 : i32, i32
  }
  func.func @transform_2(%arg0: i32) -> (i32, i32) {
    %c0_i32 = arith.constant 0 : i32
    %c0_i32_0 = arith.constant 0 : i32
    %c0_i32_1 = arith.constant 0 : i32
    return %c0_i32, %c0_i32_0 : i32, i32
  }
  func.func @transform_3(%arg0: i32) -> (i32, i32) {
    %c0_i32 = arith.constant 0 : i32
    %c0_i32_0 = arith.constant 0 : i32
    %c0_i32_1 = arith.constant 0 : i32
    return %c0_i32, %c0_i32_0 : i32, i32
  }
  func.func @transform_4(%arg0: i32) -> (i32, i32) {
    %c0_i32 = arith.constant 0 : i32
    %c0_i32_0 = arith.constant 0 : i32
    %c0_i32_1 = arith.constant 0 : i32
    return %c0_i32, %c0_i32_0 : i32, i32
  }
  func.func @transform_5(%arg0: i32) -> (i32, i32) {
    %c0_i32 = arith.constant 0 : i32
    %c0_i32_0 = arith.constant 0 : i32
    %c0_i32_1 = arith.constant 0 : i32
    return %c0_i32, %c0_i32_0 : i32, i32
  }
  func.func @transform_6(%arg0: i32) -> (i32, i32) {
    %c0_i32 = arith.constant 0 : i32
    %c0_i32_0 = arith.constant 0 : i32
    %c0_i32_1 = arith.constant 0 : i32
    return %c0_i32, %c0_i32_0 : i32, i32
  }
  func.func @transform_7(%arg0: i32) -> (i32, i32) {
    %c0_i32 = arith.constant 0 : i32
    %c0_i32_0 = arith.constant 0 : i32
    return %arg0, %c0_i32 : i32, i32
  }
}

</mosaic_0001>

<llo_original>
// kernel: tpu_custom_call.1
$region0: #{tpu_custom_call.1}
  #allocation0 [shape = 'u32[]', space=smem, size = 0x4, offset = 0x4, fixed_abs, tag = 'smem constant byte address 0x4 - core index']
  #allocation1 [shape = 'u32[144,128]{1,0:T(1,128)}', space=vmem, size = 0x12000, scoped, tag = 'internal scratch']
  #allocation2 [shape = 'f32[1,1]{1,0:T(1,128)S(1)}', space=vmem, size = 0x200, scoped, tag = 'scoped memory for tpu_custom_call.1']
  %s0 = inlined_call_operand.vmem [shape: bf16[16,391], index: 0, kind: input, shape index: {}]
  %s1 = inlined_call_operand.vmem [shape: bf16[391,32], index: 1, kind: input, shape index: {}]
  %s2 = inlined_call_operand.vmem [shape: f32[1,32], index: 2, kind: input, shape index: {}]
  %s3 = inlined_call_operand.vmem [shape: bf16[32,32], index: 3, kind: input, shape index: {}]
  %s4 = inlined_call_operand.vmem [shape: f32[1,32], index: 4, kind: input, shape index: {}]
  %s5 = inlined_call_operand.vmem [shape: bf16[32,1], index: 5, kind: input, shape index: {}]
  %s6 = inlined_call_operand.<no memory space> [shape: f32[1,1], index: 6, kind: input, shape index: {}]
  %s7 = inlined_call_operand.vmem [shape: f32[16,1], index: 7, kind: output, shape index: {}]
  %s8 = sld [smem:[#allocation0]]
  $region61: #{tpu_custom_call.1} parent=0
    _
  %s10 = ssub.s32 1, %s8
  %s11 = scalar_select 0, %s10, %s8
  %v12 = vstv %s6
  %13 = vst [vmem:[#allocation2] sm:$0x1] %v12
  loop: start=0, step=1, limit=4
  $region2: #{tpu_custom_call.1} parent=0 // loop_pre_header
    _
  $region3: #{tpu_custom_call.1} parent=0 // loop_header
    %s15 = sphi 0, %s19
    %p16 = scmp.ge.s32.totalorder %s15, 4
    %s25 = sphi 0, %s27
    %s28 = sphi 0, %s25
    %s29 = sphi 0, %s28
    %s45 = sphi 0, %s29
    %s49 = sphi 0, %s49
    %s51 = sphi 0, %s49
    %s52 = sphi 0, %s51
    %s66 = sphi 0, %s52
    %s70 = sphi 0, %s70
    %s72 = sphi 0, %s70
    %s73 = sphi 0, %s72
    %s87 = sphi 0, %s73
    %s91 = sphi 0, %s91
    %s93 = sphi 0, %s91
    %s94 = sphi 0, %s93
    %s108 = sphi 0, %s94
    %s112 = sphi 0, %s112
    %s114 = sphi 0, %s112
    %s115 = sphi 0, %s114
    %s129 = sphi 0, %s115
    %s133 = sphi 0, %s133
    %s135 = sphi 0, %s133
    %s136 = sphi 0, %s135
    %s150 = sphi 0, %s136
    %s154 = sphi 0, %s154
    %s156 = sphi 0, %s154
    %s157 = sphi 0, %s156
    %s171 = sphi 0, %s157
    %s177 = sphi 0, %s179
    %s180 = sphi 0, %s177
    %s181 = sphi 0, %s180
    %s197 = sphi 0, %s181
  $region4: #{tpu_custom_call.1} parent=0 // loop_header_branch
    %18 = sbr.rel (%p16) target = $region8
  $region5: #{tpu_custom_call.1} parent=0 // loop_body
    %s20 = ssub.s32 %s15, 1
    %s21 = ssub.s32 %s15, 2
    %s22 = sadd.s32 %s15, 1
    %s23 = ssub.s32 %s15, %s22
    %p24 = scmp.eq.s32.totalorder %s23, 0
    %s26 = sadd.s32 %s25, 1
    %s27 = scalar_select %p24, %s25, %s26
    %p30 = pneg %p24
    %p31 = scmp.eq.s32.totalorder %s15, 1
    %p32 = por %p30, %p31
    %p33 = scmp.ne.s32.totalorder %s25, %s28
    %p34 = scmp.eq.s32.totalorder %s15, 0
    %p35 = por %p33, %p34
    %p36 = scmp.ne.s32.totalorder %s25, %s28
    %p37 = scmp.eq.s32.totalorder %s20, 1
    %p38 = por %p36, %p37
    %p39 = scmp.ne.s32.totalorder %s28, %s29
    %p40 = scmp.eq.s32.totalorder %s20, 0
    %p41 = por %p39, %p40
    %p42 = scmp.ne.s32.totalorder %s28, %s29
    %p43 = scmp.eq.s32.totalorder %s21, 1
    %p44 = por %p42, %p43
    %p46 = scmp.ne.s32.totalorder %s29, %s45
    %p47 = scmp.eq.s32.totalorder %s21, 0
    %p48 = por %p46, %p47
    %s50 = sadd.s32 %s49, 1
    %p53 = scmp.eq.s32.totalorder %s15, 1
    %p54 = scmp.ne.s32.totalorder %s49, %s51
    %p55 = scmp.eq.s32.totalorder %s15, 0
    %p56 = por %p54, %p55
    %p57 = scmp.ne.s32.totalorder %s49, %s51
    %p58 = scmp.eq.s32.totalorder %s20, 1
    %p59 = por %p57, %p58
    %p60 = scmp.ne.s32.totalorder %s51, %s52
    %p61 = scmp.eq.s32.totalorder %s20, 0
    %p62 = por %p60, %p61
    %p63 = scmp.ne.s32.totalorder %s51, %s52
    %p64 = scmp.eq.s32.totalorder %s21, 1
    %p65 = por %p63, %p64
    %p67 = scmp.ne.s32.totalorder %s52, %s66
    %p68 = scmp.eq.s32.totalorder %s21, 0
    %p69 = por %p67, %p68
    %s71 = sadd.s32 %s70, 1
    %p74 = scmp.eq.s32.totalorder %s15, 1
    %p75 = scmp.ne.s32.totalorder %s70, %s72
    %p76 = scmp.eq.s32.totalorder %s15, 0
    %p77 = por %p75, %p76
    %p78 = scmp.ne.s32.totalorder %s70, %s72
    %p79 = scmp.eq.s32.totalorder %s20, 1
    %p80 = por %p78, %p79
    %p81 = scmp.ne.s32.totalorder %s72, %s73
    %p82 = scmp.eq.s32.totalorder %s20, 0
    %p83 = por %p81, %p82
    %p84 = scmp.ne.s32.totalorder %s72, %s73
    %p85 = scmp.eq.s32.totalorder %s21, 1
    %p86 = por %p84, %p85
    %p88 = scmp.ne.s32.totalorder %s73, %s87
    %p89 = scmp.eq.s32.totalorder %s21, 0
    %p90 = por %p88, %p89
    %s92 = sadd.s32 %s91, 1
    %p95 = scmp.eq.s32.totalorder %s15, 1
    %p96 = scmp.ne.s32.totalorder %s91, %s93
    %p97 = scmp.eq.s32.totalorder %s15, 0
    %p98 = por %p96, %p97
    %p99 = scmp.ne.s32.totalorder %s91, %s93
    %p100 = scmp.eq.s32.totalorder %s20, 1
    %p101 = por %p99, %p100
    %p102 = scmp.ne.s32.totalorder %s93, %s94
    %p103 = scmp.eq.s32.totalorder %s20, 0
    %p104 = por %p102, %p103
    %p105 = scmp.ne.s32.totalorder %s93, %s94
    %p106 = scmp.eq.s32.totalorder %s21, 1
    %p107 = por %p105, %p106
    %p109 = scmp.ne.s32.totalorder %s94, %s108
    %p110 = scmp.eq.s32.totalorder %s21, 0
    %p111 = por %p109, %p110
    %s113 = sadd.s32 %s112, 1
    %p116 = scmp.eq.s32.totalorder %s15, 1
    %p117 = scmp.ne.s32.totalorder %s112, %s114
    %p118 = scmp.eq.s32.totalorder %s15, 0
    %p119 = por %p117, %p118
    %p120 = scmp.ne.s32.totalorder %s112, %s114
    %p121 = scmp.eq.s32.totalorder %s20, 1
    %p122 = por %p120, %p121
    %p123 = scmp.ne.s32.totalorder %s114, %s115
    %p124 = scmp.eq.s32.totalorder %s20, 0
    %p125 = por %p123, %p124
    %p126 = scmp.ne.s32.totalorder %s114, %s115
    %p127 = scmp.eq.s32.totalorder %s21, 1
    %p128 = por %p126, %p127
    %p130 = scmp.ne.s32.totalorder %s115, %s129
    %p131 = scmp.eq.s32.totalorder %s21, 0
    %p132 = por %p130, %p131
    %s134 = sadd.s32 %s133, 1
    %p137 = scmp.eq.s32.totalorder %s15, 1
    %p138 = scmp.ne.s32.totalorder %s133, %s135
    %p139 = scmp.eq.s32.totalorder %s15, 0
    %p140 = por %p138, %p139
    %p141 = scmp.ne.s32.totalorder %s133, %s135
    %p142 = scmp.eq.s32.totalorder %s20, 1
    %p143 = por %p141, %p142
    %p144 = scmp.ne.s32.totalorder %s135, %s136
    %p145 = scmp.eq.s32.totalorder %s20, 0
    %p146 = por %p144, %p145
    %p147 = scmp.ne.s32.totalorder %s135, %s136
    %p148 = scmp.eq.s32.totalorder %s21, 1
    %p149 = por %p147, %p148
    %p151 = scmp.ne.s32.totalorder %s136, %s150
    %p152 = scmp.eq.s32.totalorder %s21, 0
    %p153 = por %p151, %p152
    %s155 = sadd.s32 %s154, 1
    %p158 = scmp.eq.s32.totalorder %s15, 1
    %p159 = scmp.ne.s32.totalorder %s154, %s156
    %p160 = scmp.eq.s32.totalorder %s15, 0
    %p161 = por %p159, %p160
    %p162 = scmp.ne.s32.totalorder %s154, %s156
    %p163 = scmp.eq.s32.totalorder %s20, 1
    %p164 = por %p162, %p163
    %p165 = scmp.ne.s32.totalorder %s156, %s157
    %p166 = scmp.eq.s32.totalorder %s20, 0
    %p167 = por %p165, %p166
    %p168 = scmp.ne.s32.totalorder %s156, %s157
    %p169 = scmp.eq.s32.totalorder %s21, 1
    %p170 = por %p168, %p169
    %p172 = scmp.ne.s32.totalorder %s157, %s171
    %p173 = scmp.eq.s32.totalorder %s21, 0
    %p174 = por %p172, %p173
    %s175 = ssub.s32 %s15, %s22
    %p176 = scmp.eq.s32.totalorder %s175, 0
    %s178 = sadd.s32 %s177, 1
    %s179 = scalar_select %p176, %s177, %s178
    %p182 = pneg %p176
    %p183 = scmp.eq.s32.totalorder %s15, 1
    %p184 = por %p182, %p183
    %p185 = scmp.ne.s32.totalorder %s177, %s180
    %p186 = scmp.eq.s32.totalorder %s15, 0
    %p187 = por %p185, %p186
    %p188 = scmp.ne.s32.totalorder %s177, %s180
    %p189 = scmp.eq.s32.totalorder %s20, 1
    %p190 = por %p188, %p189
    %p191 = scmp.ne.s32.totalorder %s180, %s181
    %p192 = scmp.eq.s32.totalorder %s20, 0
    %p193 = por %p191, %p192
    %p194 = scmp.ne.s32.totalorder %s180, %s181
    %p195 = scmp.eq.s32.totalorder %s21, 1
    %p196 = por %p194, %p195
    %p198 = scmp.ne.s32.totalorder %s181, %s197
    %p199 = scmp.eq.s32.totalorder %s21, 0
    %p200 = por %p198, %p199
    %p201 = scmp.le.s32.totalorder 1, %s15
    %p202 = scmp.lt.s32.totalorder %s15, 3
    %p203 = pnand %p201, %p202
    %p204 = pneg %p203
    // Predicated region
    $region9: #{tpu_custom_call.1} parent=5 // pred_check
      _
    $region10: #{tpu_custom_call.1} parent=5 // pred_check_branch
      %206 = sbr.rel (%p203) target = $region12
    $region11: #{tpu_custom_call.1} parent=5 // pred_region
      %s207 = ssub.s32 %s15, 1
      // Predicated region
      $region13: #{tpu_custom_call.1} parent=11 // pred_check
        %p208 = pneg %p62
      $region14: #{tpu_custom_call.1} parent=11 // pred_check_branch
        %210 = sbr.rel (%p208) target = $region16
      $region15: #{tpu_custom_call.1} parent=11 // pred_region
        _
      $region16: #{tpu_custom_call.1} parent=11 // pred_fallthru
        _
      // Predicated region
      $region17: #{tpu_custom_call.1} parent=11 // pred_check
        %p211 = pneg %p83
      $region18: #{tpu_custom_call.1} parent=11 // pred_check_branch
        %213 = sbr.rel (%p211) target = $region20
      $region19: #{tpu_custom_call.1} parent=11 // pred_region
        _
      $region20: #{tpu_custom_call.1} parent=11 // pred_fallthru
        _
      // Predicated region
      $region21: #{tpu_custom_call.1} parent=11 // pred_check
        %p214 = pneg %p104
      $region22: #{tpu_custom_call.1} parent=11 // pred_check_branch
        %216 = sbr.rel (%p214) target = $region24
      $region23: #{tpu_custom_call.1} parent=11 // pred_region
        _
      $region24: #{tpu_custom_call.1} parent=11 // pred_fallthru
        _
      // Predicated region
      $region25: #{tpu_custom_call.1} parent=11 // pred_check
        %p217 = pneg %p125
      $region26: #{tpu_custom_call.1} parent=11 // pred_check_branch
        %219 = sbr.rel (%p217) target = $region28
      $region27: #{tpu_custom_call.1} parent=11 // pred_region
        _
      $region28: #{tpu_custom_call.1} parent=11 // pred_fallthru
        _
      // Predicated region
      $region29: #{tpu_custom_call.1} parent=11 // pred_check
        %p220 = pneg %p146
      $region30: #{tpu_custom_call.1} parent=11 // pred_check_branch
        %222 = sbr.rel (%p220) target = $region32
      $region31: #{tpu_custom_call.1} parent=11 // pred_region
        _
      $region32: #{tpu_custom_call.1} parent=11 // pred_fallthru
        _
      // Predicated region
      $region33: #{tpu_custom_call.1} parent=11 // pred_check
        %p223 = pneg %p167
      $region34: #{tpu_custom_call.1} parent=11 // pred_check_branch
        %225 = sbr.rel (%p223) target = $region36
      $region35: #{tpu_custom_call.1} parent=11 // pred_region
        _
      $region36: #{tpu_custom_call.1} parent=11 // pred_fallthru
        _
    $region12: #{tpu_custom_call.1} parent=5 // pred_fallthru
      _
    %p226 = scmp.lt.s32.totalorder %s15, 2
    // Predicated region
    $region37: #{tpu_custom_call.1} parent=5 // pred_check
      %p227 = pneg %p226
    $region38: #{tpu_custom_call.1} parent=5 // pred_check_branch
      %229 = sbr.rel (%p227) target = $region40
    $region39: #{tpu_custom_call.1} parent=5 // pred_region
      // Predicated region
      $region41: #{tpu_custom_call.1} parent=39 // pred_check
        %p230 = pneg %p35
      $region42: #{tpu_custom_call.1} parent=39 // pred_check_branch
        %232 = sbr.rel (%p230) target = $region44
      $region43: #{tpu_custom_call.1} parent=39 // pred_region
        %p233 = scmp.lt.s32.totalorder %s15, 1
        %s234 = scalar_select %p233, %s15, 1
        %s235 = smul.addr %s234, 4
        %s236 = smul.addr %s235, 4
        %s237 = scalar_lea.vmem %s0, %s236
      $region44: #{tpu_custom_call.1} parent=39 // pred_fallthru
        _
    $region40: #{tpu_custom_call.1} parent=5 // pred_fallthru
      _
    %p238 = scmp.le.s32.totalorder 1, %s15
    %p239 = scmp.lt.s32.totalorder %s15, 3
    %p240 = pnand %p238, %p239
    %p241 = pneg %p240
    // Predicated region
    $region45: #{tpu_custom_call.1} parent=5 // pred_check
      _
    $region46: #{tpu_custom_call.1} parent=5 // pred_check_branch
      %243 = sbr.rel (%p240) target = $region48
    $region47: #{tpu_custom_call.1} parent=5 // pred_region
      %s244 = ssub.s32 %s15, 1
      %p245 = scmp.lt.s32.totalorder %s20, 1
      %s246 = scalar_select %p245, %s20, 1
      %s247 = smul.addr %s246, 4
      %s248 = smul.addr %s247, 4
      %s249 = scalar_lea.vmem %s0, %s248
      %p250 = pneg %p41
      %p251 = pneg %p38
      %p252 = pneg %p62
      %p253 = pneg %p59
      %p254 = pneg %p83
      %p255 = pneg %p80
      %p256 = pneg %p104
      %p257 = pneg %p101
      %p258 = pneg %p125
      %p259 = pneg %p122
      %p260 = pneg %p146
      %p261 = pneg %p143
      %p262 = pneg %p167
      %p263 = pneg %p164
      %p264 = pneg %p193
      %p265 = pneg %p190
      %p266 = scmp.lt.s32.totalorder %s20, 1
      %s267 = scalar_select %p266, %s20, 1
      %s268 = smul.addr %s267, 8
      %s269 = scalar_lea.vmem %s7, %s268
      %p270 = scmp.lt.s32.totalorder %s20, 1
      %s271 = scalar_select %p270, %s20, 1
      %s272 = smul.addr %s271, 4
      %s273 = smul.addr %s272, 4
      %s274 = scalar_lea.vmem %s0, %s273
      %p275 = scmp.lt.s32.totalorder %s20, 1
      %s276 = scalar_select %p275, %s20, 1
      %s277 = smul.addr %s276, 8
      %s278 = scalar_lea.vmem %s7, %s277
      %v280 = vld [vmem:[%s274] sm:$0xff]
      %v281 = vld [vmem:[%s274 + $0x8] sm:$0xff]
      %v282 = vld [vmem:[%s1] sm:$0xf]
      %v283 = vld [vmem:[%s1 + $0x4] sm:$0xf]
      %v284 = vld [vmem:[%s1 + $0x8] sm:$0xf]
      %v285 = vld [vmem:[%s1 + $0xc] sm:$0xf]
      %v286 = vld [vmem:[%s1 + $0x10] sm:$0xf]
      %v287 = vld [vmem:[%s1 + $0x14] sm:$0xf]
      %v288 = vld [vmem:[%s1 + $0x18] sm:$0xf]
      %v289 = vld [vmem:[%s1 + $0x1c] sm:$0xf]
      %v290 = vld [vmem:[%s1 + $0x20] sm:$0xf]
      %v291 = vld [vmem:[%s1 + $0x24] sm:$0xf]
      %v292 = vld [vmem:[%s1 + $0x28] sm:$0xf]
      %v293 = vld [vmem:[%s1 + $0x2c] sm:$0xf]
      %v294 = vld [vmem:[%s1 + $0x30] sm:$0xf]
      %v295 = vld [vmem:[%s1 + $0x34] sm:$0xf]
      %v296 = vld [vmem:[%s1 + $0x38] sm:$0xf]
      %v297 = vld [vmem:[%s1 + $0x3c] sm:$0xf]
      %v298 = vld [vmem:[%s1 + $0x40] sm:$0xf]
      %v299 = vld [vmem:[%s1 + $0x44] sm:$0xf]
      %v300 = vld [vmem:[%s1 + $0x48] sm:$0xf]
      %v301 = vld [vmem:[%s1 + $0x4c] sm:$0xf]
      %v302 = vld [vmem:[%s1 + $0x50] sm:$0xf]
      %v303 = vld [vmem:[%s1 + $0x54] sm:$0xf]
      %v304 = vld [vmem:[%s1 + $0x58] sm:$0xf]
      %v305 = vld [vmem:[%s1 + $0x5c] sm:$0xf]
      %v306 = vld [vmem:[%s1 + $0x60] sm:$0xf]
      %v307 = vld [vmem:[%s1 + $0x64] sm:$0xf]
      %v308 = vld [vmem:[%s1 + $0x68] sm:$0xf]
      %v309 = vld [vmem:[%s1 + $0x6c] sm:$0xf]
      %v310 = vld [vmem:[%s1 + $0x70] sm:$0xf]
      %v311 = vld [vmem:[%s1 + $0x74] sm:$0xf]
      %v312 = vld [vmem:[%s1 + $0x78] sm:$0xf]
      %v313 = vld [vmem:[%s1 + $0x7c] sm:$0xf]
      %v314 = vld [vmem:[%s1 + $0x80] sm:$0xf]
      %v315 = vld [vmem:[%s1 + $0x84] sm:$0xf]
      %v316 = vld [vmem:[%s1 + $0x88] sm:$0xf]
      %v317 = vld [vmem:[%s1 + $0x8c] sm:$0xf]
      %v318 = vld [vmem:[%s1 + $0x90] sm:$0xf]
      %v319 = vld [vmem:[%s1 + $0x94] sm:$0xf]
      %v320 = vld [vmem:[%s1 + $0x98] sm:$0xf]
      %v321 = vld [vmem:[%s1 + $0x9c] sm:$0xf]
      %v322 = vld [vmem:[%s1 + $0xa0] sm:$0xf]
      %v323 = vld [vmem:[%s1 + $0xa4] sm:$0xf]
      %v324 = vld [vmem:[%s1 + $0xa8] sm:$0xf]
      %v325 = vld [vmem:[%s1 + $0xac] sm:$0xf]
      %v326 = vld [vmem:[%s1 + $0xb0] sm:$0xf]
      %v327 = vld [vmem:[%s1 + $0xb4] sm:$0xf]
      %v328 = vld [vmem:[%s1 + $0xb8] sm:$0xf]
      %v329 = vld [vmem:[%s1 + $0xbc] sm:$0xf]
      %v330 = vld [vmem:[%s1 + $0xc0] sm:$0xf]
      %v331 = vld [vmem:[%s2] sm:$0x1]
      %v333 = vlaneseq
      %v334 = vshrl.u32 %v333, 7
      %v335 = vsub.s32 0, %v334
      %v336 = vrot.slane %v331, %v335
      %v340 = vunpack.c.l.b16 %v280
      %v341 = vunpack.c.h.b16 %v280
      %v342 = vunpack.c.l.b16 %v281
      %v343 = vunpack.c.h.b16 %v281
      %v344 = vpack.c.b16 %v340, %v340
      %v345 = vpack.c.b16 %v341, %v341
      %v346 = vpack.c.b16 %v342, %v342
      %v347 = vpack.c.b16 %v343, %v343
      %v400 = vunpack.c.l.b16 %v282
      %v401 = vunpack.c.l.b16 %v283
      %v402 = vunpack.c.l.b16 %v284
      %v403 = vunpack.c.l.b16 %v285
      %v404 = vunpack.c.l.b16 %v286
      %v405 = vunpack.c.l.b16 %v287
      %v406 = vunpack.c.l.b16 %v288
      %v407 = vunpack.c.l.b16 %v289
      %v408 = vunpack.c.l.b16 %v290
      %v409 = vunpack.c.l.b16 %v291
      %v410 = vunpack.c.l.b16 %v292
      %v411 = vunpack.c.l.b16 %v293
      %v412 = vunpack.c.l.b16 %v294
      %v413 = vunpack.c.l.b16 %v295
      %v414 = vunpack.c.l.b16 %v296
      %v415 = vunpack.c.l.b16 %v297
      %v416 = vunpack.c.l.b16 %v298
      %v417 = vunpack.c.l.b16 %v299
      %v418 = vunpack.c.l.b16 %v300
      %v419 = vunpack.c.l.b16 %v301
      %v420 = vunpack.c.l.b16 %v302
      %v421 = vunpack.c.l.b16 %v303
      %v422 = vunpack.c.l.b16 %v304
      %v423 = vunpack.c.l.b16 %v305
      %v424 = vunpack.c.l.b16 %v306
      %v425 = vunpack.c.l.b16 %v307
      %v426 = vunpack.c.l.b16 %v308
      %v427 = vunpack.c.l.b16 %v309
      %v428 = vunpack.c.l.b16 %v310
      %v429 = vunpack.c.l.b16 %v311
      %v430 = vunpack.c.l.b16 %v312
      %v431 = vunpack.c.l.b16 %v313
      %v432 = vunpack.c.l.b16 %v314
      %v433 = vunpack.c.l.b16 %v315
      %v434 = vunpack.c.l.b16 %v316
      %v435 = vunpack.c.l.b16 %v317
      %v436 = vunpack.c.l.b16 %v318
      %v437 = vunpack.c.l.b16 %v319
      %v438 = vunpack.c.l.b16 %v320
      %v439 = vunpack.c.l.b16 %v321
      %v440 = vunpack.c.l.b16 %v322
      %v441 = vunpack.c.l.b16 %v323
      %v442 = vunpack.c.l.b16 %v324
      %v443 = vunpack.c.l.b16 %v325
      %v444 = vunpack.c.l.b16 %v326
      %v445 = vunpack.c.l.b16 %v327
      %v446 = vunpack.c.l.b16 %v328
      %v447 = vunpack.c.l.b16 %v329
      %v448 = vunpack.c.l.b16 %v330
      %v449 = vpack.c.b16 %v401, %v400
      %v450 = vpack.c.b16 %v403, %v402
      %v451 = vpack.c.b16 %v405, %v404
      %v452 = vpack.c.b16 %v407, %v406
      %v453 = vpack.c.b16 %v409, %v408
      %v454 = vpack.c.b16 %v411, %v410
      %v455 = vpack.c.b16 %v413, %v412
      %v456 = vpack.c.b16 %v415, %v414
      %v457 = vpack.c.b16 %v417, %v416
      %v458 = vpack.c.b16 %v419, %v418
      %v459 = vpack.c.b16 %v421, %v420
      %v460 = vpack.c.b16 %v423, %v422
      %v461 = vpack.c.b16 %v425, %v424
      %v462 = vpack.c.b16 %v427, %v426
      %v463 = vpack.c.b16 %v429, %v428
      %v464 = vpack.c.b16 %v431, %v430
      %v465 = vpack.c.b16 %v433, %v432
      %v466 = vpack.c.b16 %v435, %v434
      %v467 = vpack.c.b16 %v437, %v436
      %v468 = vpack.c.b16 %v439, %v438
      %v469 = vpack.c.b16 %v441, %v440
      %v470 = vpack.c.b16 %v443, %v442
      %v471 = vpack.c.b16 %v445, %v444
      %v472 = vpack.c.b16 %v447, %v446
      %v473 = vpack.c.b16 %v448, %v448
      %vm498 = vcmask 56320
      %v500 = vsel %vm498, %v347, 0
      %vm502 = vcmask 1042432
      %vm503 = vcmask 1043456
      %v504 = vsel %vm502, 4294967295, 65535
      %v505 = vsel %vm503, %v504, 0
      %v507 = vand.u32 %v473, %v505
      %509 = vmatprep.subr.bf16.mxu0 0
      %510 = vmatpush1.bf16.msra.mxu0 %v456
      %511 = vmatprep.subr.bf16.mxu0 0
      %512 = vmatpush1.bf16.msra.mxu0 %v455
      %513 = vmatprep.subr.bf16.mxu0 0
      %514 = vmatpush1.bf16.msra.mxu0 %v454
      %515 = vmatprep.subr.bf16.mxu0 0
      %516 = vmatpush1.bf16.msra.mxu0 %v453
      %517 = vmatprep.subr.bf16.mxu0 0
      %518 = vmatpush1.bf16.msra.mxu0 %v452
      %519 = vmatprep.subr.bf16.mxu0 0
      %520 = vmatpush1.bf16.msra.mxu0 %v451
      %521 = vmatprep.subr.bf16.mxu0 0
      %522 = vmatpush1.bf16.msra.mxu0 %v450
      %523 = vmatprep.subr.bf16.mxu0 0
      %524 = vmatpush1.bf16.msra.mxu0 %v449
      %525 = vmatprep.subr.bf16.mxu0 0
      %526 = vmatpush2.bf16.msra.mxu0 %v464
      %527 = vmatprep.subr.bf16.mxu0 0
      %528 = vmatpush2.bf16.msra.mxu0 %v463
      %529 = vmatprep.subr.bf16.mxu0 0
      %530 = vmatpush2.bf16.msra.mxu0 %v462
      %531 = vmatprep.subr.bf16.mxu0 0
      %532 = vmatpush2.bf16.msra.mxu0 %v461
      %533 = vmatprep.subr.bf16.mxu0 0
      %534 = vmatpush2.bf16.msra.mxu0 %v460
      %535 = vmatprep.subr.bf16.mxu0 0
      %536 = vmatpush2.bf16.msra.mxu0 %v459
      %537 = vmatprep.subr.bf16.mxu0 0
      %538 = vmatpush2.bf16.msra.mxu0 %v458
      %539 = vmatprep.subr.bf16.mxu0 0
      %540 = vmatpush2.bf16.msra.mxu0 %v457
      %541 = vmatprep.mubr.bf16.mxu0 %v345
      %542 = vmatmul.mubr.bf16.gmra.mxu0 %v344
      %v543 = vpop.f32.mrf.mxu0
      %v544 = vadd.f32 %v336, %v543
      %v545 = vpop.f32.mrf.mxu0
      %v546 = vpop.f32.mrf.mxu0
      %v547 = vpop.f32.mrf.mxu0
      %548 = vdwg.mxu0
      %549 = vmatprep.subr.bf16.mxu0 0
      %550 = vmatpush1.bf16.msra.mxu0 %v472
      %551 = vmatprep.subr.bf16.mxu0 0
      %552 = vmatpush1.bf16.msra.mxu0 %v471
      %553 = vmatprep.subr.bf16.mxu0 0
      %554 = vmatpush1.bf16.msra.mxu0 %v470
      %555 = vmatprep.subr.bf16.mxu0 0
      %556 = vmatpush1.bf16.msra.mxu0 %v469
      %557 = vmatprep.subr.bf16.mxu0 0
      %558 = vmatpush1.bf16.msra.mxu0 %v468
      %559 = vmatprep.subr.bf16.mxu0 0
      %560 = vmatpush1.bf16.msra.mxu0 %v467
      %561 = vmatprep.subr.bf16.mxu0 0
      %562 = vmatpush1.bf16.msra.mxu0 %v466
      %563 = vmatprep.subr.bf16.mxu0 0
      %564 = vmatpush1.bf16.msra.mxu0 %v465
      %565 = vmatprep.subr.bf16.mxu0 0
      %566 = vmatpush2.bf16.msra.mxu0 0
      %567 = vmatprep.subr.bf16.mxu0 0
      %568 = vmatpush2.bf16.msra.mxu0 0
      %569 = vmatprep.subr.bf16.mxu0 0
      %570 = vmatpush2.bf16.msra.mxu0 0
      %571 = vmatprep.subr.bf16.mxu0 0
      %572 = vmatpush2.bf16.msra.mxu0 0
      %573 = vmatprep.subr.bf16.mxu0 0
      %574 = vmatpush2.bf16.msra.mxu0 0
      %575 = vmatprep.subr.bf16.mxu0 0
      %576 = vmatpush2.bf16.msra.mxu0 0
      %577 = vmatprep.subr.bf16.mxu0 0
      %578 = vmatpush2.bf16.msra.mxu0 0
      %579 = vmatprep.subr.bf16.mxu0 0
      %580 = vmatpush2.bf16.msra.mxu0 %v507
      %581 = vmatprep.mubr.bf16.mxu0 %v500
      %582 = vmatmul.mubr.bf16.gmra.mxu0 %v346
      %v583 = vpop.f32.mrf.mxu0
      %v584 = vadd.f32 %v544, %v583
      %v585 = vpop.f32.mrf.mxu0
      %v586 = vpop.f32.mrf.mxu0
      %v587 = vpop.f32.mrf.mxu0
      %588 = vdwg.mxu0
      %v589 = vmax.f32 %v584, 0.0
      %v590 = vpack.c.bf16 %v589, %v589
      %v591 = vld [vmem:[%s3] sm:$0xf]
      %v592 = vld [vmem:[%s3 + $0x4] sm:$0xf]
      %v593 = vld [vmem:[%s3 + $0x8] sm:$0xf]
      %v594 = vld [vmem:[%s3 + $0xc] sm:$0xf]
      %v595 = vld [vmem:[%s4] sm:$0x1]
      %v597 = vlaneseq
      %v598 = vshrl.u32 %v597, 7
      %v599 = vsub.s32 0, %v598
      %v600 = vrot.slane %v595, %v599
      %v606 = vunpack.c.l.b16 %v591
      %v607 = vunpack.c.l.b16 %v592
      %v608 = vunpack.c.l.b16 %v593
      %v609 = vunpack.c.l.b16 %v594
      %v610 = vpack.c.b16 %v607, %v606
      %v611 = vpack.c.b16 %v609, %v608
      %vm614 = vcmask 261120
      %v616 = vsel %vm614, %v590, 0
      %618 = vmatprep.subr.bf16.mxu0 0
      %619 = vmatpush1.bf16.msra.mxu0 0
      %620 = vmatprep.subr.bf16.mxu0 0
      %621 = vmatpush1.bf16.msra.mxu0 0
      %622 = vmatprep.subr.bf16.mxu0 0
      %623 = vmatpush1.bf16.msra.mxu0 0
      %624 = vmatprep.subr.bf16.mxu0 0
      %625 = vmatpush1.bf16.msra.mxu0 0
      %626 = vmatprep.subr.bf16.mxu0 0
      %627 = vmatpush1.bf16.msra.mxu0 0
      %628 = vmatprep.subr.bf16.mxu0 0
      %629 = vmatpush1.bf16.msra.mxu0 0
      %630 = vmatprep.subr.bf16.mxu0 0
      %631 = vmatpush1.bf16.msra.mxu0 %v611
      %632 = vmatprep.subr.bf16.mxu0 0
      %633 = vmatpush1.bf16.msra.mxu0 %v610
      %634 = vmatprep.subr.bf16.mxu0 0
      %635 = vmatpush2.bf16.msra.mxu0 0
      %636 = vmatprep.subr.bf16.mxu0 0
      %637 = vmatpush2.bf16.msra.mxu0 0
      %638 = vmatprep.subr.bf16.mxu0 0
      %639 = vmatpush2.bf16.msra.mxu0 0
      %640 = vmatprep.subr.bf16.mxu0 0
      %641 = vmatpush2.bf16.msra.mxu0 0
      %642 = vmatprep.subr.bf16.mxu0 0
      %643 = vmatpush2.bf16.msra.mxu0 0
      %644 = vmatprep.subr.bf16.mxu0 0
      %645 = vmatpush2.bf16.msra.mxu0 0
      %646 = vmatprep.subr.bf16.mxu0 0
      %647 = vmatpush2.bf16.msra.mxu0 0
      %648 = vmatprep.subr.bf16.mxu0 0
      %649 = vmatpush2.bf16.msra.mxu0 0
      %650 = vmatprep.mubr.bf16.mxu0 0
      %651 = vmatmul.mubr.bf16.gmra.mxu0 %v616
      %v652 = vpop.f32.mrf.mxu0
      %v653 = vadd.f32 %v600, %v652
      %v654 = vpop.f32.mrf.mxu0
      %v655 = vpop.f32.mrf.mxu0
      %v656 = vpop.f32.mrf.mxu0
      %657 = vdwg.mxu0
      %v658 = vmax.f32 %v653, 0.0
      %v659 = vpack.c.bf16 %v658, %v658
      %v660 = vld [vmem:[%s5] sm:$0xf]
      %v661 = vld [vmem:[%s5 + $0x4] sm:$0xf]
      %v662 = vld [vmem:[%s5 + $0x8] sm:$0xf]
      %v663 = vld [vmem:[%s5 + $0xc] sm:$0xf]
      %v664 = vld [vmem:[#allocation2] sm:$0x1]
      %v666 = vlaneseq
      %v667 = vshrl.u32 %v666, 7
      %v668 = vsub.s32 0, %v667
      %v669 = vrot.slane %v664, %v668
      %v675 = vunpack.c.l.b16 %v660
      %v676 = vunpack.c.l.b16 %v661
      %v677 = vunpack.c.l.b16 %v662
      %v678 = vunpack.c.l.b16 %v663
      %v679 = vpack.c.b16 %v676, %v675
      %v680 = vpack.c.b16 %v678, %v677
      %v684 = vsel %vm614, %v659, 0
      %686 = vmatprep.subr.bf16.mxu0 0
      %687 = vmatpush1.bf16.msra.mxu0 0
      %688 = vmatprep.subr.bf16.mxu0 0
      %689 = vmatpush1.bf16.msra.mxu0 0
      %690 = vmatprep.subr.bf16.mxu0 0
      %691 = vmatpush1.bf16.msra.mxu0 0
      %692 = vmatprep.subr.bf16.mxu0 0
      %693 = vmatpush1.bf16.msra.mxu0 0
      %694 = vmatprep.subr.bf16.mxu0 0
      %695 = vmatpush1.bf16.msra.mxu0 0
      %696 = vmatprep.subr.bf16.mxu0 0
      %697 = vmatpush1.bf16.msra.mxu0 0
      %698 = vmatprep.subr.bf16.mxu0 0
      %699 = vmatpush1.bf16.msra.mxu0 %v680
      %700 = vmatprep.subr.bf16.mxu0 0
      %701 = vmatpush1.bf16.msra.mxu0 %v679
      %702 = vmatprep.subr.bf16.mxu0 0
      %703 = vmatpush2.bf16.msra.mxu0 0
      %704 = vmatprep.subr.bf16.mxu0 0
      %705 = vmatpush2.bf16.msra.mxu0 0
      %706 = vmatprep.subr.bf16.mxu0 0
      %707 = vmatpush2.bf16.msra.mxu0 0
      %708 = vmatprep.subr.bf16.mxu0 0
      %709 = vmatpush2.bf16.msra.mxu0 0
      %710 = vmatprep.subr.bf16.mxu0 0
      %711 = vmatpush2.bf16.msra.mxu0 0
      %712 = vmatprep.subr.bf16.mxu0 0
      %713 = vmatpush2.bf16.msra.mxu0 0
      %714 = vmatprep.subr.bf16.mxu0 0
      %715 = vmatpush2.bf16.msra.mxu0 0
      %716 = vmatprep.subr.bf16.mxu0 0
      %717 = vmatpush2.bf16.msra.mxu0 0
      %718 = vmatprep.mubr.bf16.mxu0 0
      %719 = vmatmul.mubr.bf16.gmra.mxu0 %v684
      %v720 = vpop.f32.mrf.mxu0
      %v721 = vadd.f32 %v669, %v720
      %v722 = vpop.f32.mrf.mxu0
      %v723 = vpop.f32.mrf.mxu0
      %v724 = vpop.f32.mrf.mxu0
      %725 = vdwg.mxu0
      %vm726 = vcmask 7168
      %727 = vst.msk [vmem:[%s278] sm:$0xff] %vm726, %v721
      %p728 = scmp.lt.s32.totalorder %s20, 1
      %s729 = scalar_select %p728, %s20, 1
      %s730 = smul.addr %s729, 8
      %s731 = scalar_lea.vmem %s7, %s730
      // Predicated region
      $region49: #{tpu_custom_call.1} parent=47 // pred_check
        %p732 = pneg %p190
      $region50: #{tpu_custom_call.1} parent=47 // pred_check_branch
        %734 = sbr.rel (%p732) target = $region52
      $region51: #{tpu_custom_call.1} parent=47 // pred_region
        _
      $region52: #{tpu_custom_call.1} parent=47 // pred_fallthru
        _
    $region48: #{tpu_custom_call.1} parent=5 // pred_fallthru
      _
    %p735 = scmp.le.s32.totalorder 2, %s15
    // Predicated region
    $region53: #{tpu_custom_call.1} parent=5 // pred_check
      %p736 = pneg %p735
    $region54: #{tpu_custom_call.1} parent=5 // pred_check_branch
      %738 = sbr.rel (%p736) target = $region56
    $region55: #{tpu_custom_call.1} parent=5 // pred_region
      %s739 = ssub.s32 %s15, 2
      // Predicated region
      $region57: #{tpu_custom_call.1} parent=55 // pred_check
        %p740 = pneg %p196
      $region58: #{tpu_custom_call.1} parent=55 // pred_check_branch
        %742 = sbr.rel (%p740) target = $region60
      $region59: #{tpu_custom_call.1} parent=55 // pred_region
        %p743 = scmp.lt.s32.totalorder %s21, 1
        %s744 = scalar_select %p743, %s21, 1
        %s745 = smul.addr %s744, 8
        %s746 = scalar_lea.vmem %s7, %s745
      $region60: #{tpu_custom_call.1} parent=55 // pred_fallthru
        _
    $region56: #{tpu_custom_call.1} parent=5 // pred_fallthru
      _
  $region6: #{tpu_custom_call.1} parent=0 // loop_footer
    %s19 = sadd.s32 1, %s15
  $region7: #{tpu_custom_call.1} parent=0 // loop_footer_branch
    %14 = sbr.rel target = $region3
  $region8: #{tpu_custom_call.1} parent=0 // loop_exit
    _

</llo_original>
